<compile_context>
chip_gen: v7x
topology: tpu7x:2x2x1
jax: 0.10.0
libtpu: 0.0.40
codegen_flags: <defaults>
</compile_context>

<pallas_src>
import functools

import jax
import jax.numpy as jnp
from jax.experimental import pallas as pl
from jax.experimental.pallas import tpu as pltpu


def _focal_loss_kernel(*refs, gamma: float, num_rows: int,
                       size_average: bool, has_alpha: bool):
    if has_alpha:
        logits_ref, target_ref, alpha_ref, out_ref = refs
    else:
        logits_ref, target_ref, out_ref = refs
        alpha_ref = None

    i = pl.program_id(0)

    x = logits_ref[...].astype(jnp.float32)          # (TB, C)
    t = target_ref[...]                              # (TB, 1) int32
    tb, c = x.shape

    # log-softmax pieces (no normalized probability tensor is materialized).
    m = jnp.max(x, axis=1, keepdims=True)            # (TB, 1)
    z = x - m
    lse = jnp.log(jnp.sum(jnp.exp(z), axis=1, keepdims=True))   # (TB, 1)

    # Gather z[i, t[i]] via a masked lane-reduce (rides the lane reduction we
    # already pay for; avoids an arbitrary-offset lane slice / relayout).
    lane = jax.lax.broadcasted_iota(jnp.int32, (tb, c), 1)
    sel = lane == t                                  # (TB, C) one-hot mask
    z_t = jnp.sum(jnp.where(sel, z, 0.0), axis=1, keepdims=True)  # (TB, 1)

    logpt = z_t - lse                                # log p_target, (TB, 1)
    pt = jnp.exp(logpt)                              # before alpha scaling

    if has_alpha:
        a = alpha_ref[...].astype(jnp.float32)       # (1, C)
        at = jnp.sum(jnp.where(sel, a, 0.0), axis=1, keepdims=True)
        logpt = logpt * at

    loss = -((1.0 - pt) ** gamma) * logpt            # (TB, 1)

    # Mask rows that only exist because of padding up to a multiple of TB.
    row = jax.lax.broadcasted_iota(jnp.int32, (tb, 1), 0) + i * tb
    valid = row < num_rows
    partial = jnp.sum(jnp.where(valid, loss, 0.0))

    @pl.when(i == 0)
    def _init():
        out_ref[...] = jnp.zeros_like(out_ref)

    out_ref[...] = out_ref[...] + partial

    @pl.when(i == pl.num_programs(0) - 1)
    def _finalize():
        if size_average:
            out_ref[...] = out_ref[...] / jnp.float32(num_rows)


def _choose_tile_rows(num_rows: int, num_classes: int) -> int:
    # Keep the f32 logits tile around <= 2 MiB so double-buffering fits
    # comfortably in VMEM on every generation (v7x has only 64 MiB per TC).
    bytes_per_row = max(num_classes, 1) * 4
    max_rows = max(8, (2 * 1024 * 1024) // bytes_per_row)
    tb = min(num_rows, max_rows, 1024)
    return max(8, ((tb + 7) // 8) * 8)


def focal_loss(logits: jax.Array, target: jax.Array, *, gamma: float = 0.0,
               alpha=None, size_average: bool = True,
               tile_rows: int | None = None) -> jax.Array:
    """Pallas TPU FocalLoss. logits: (N, C) or (N, C, *spatial); target int ids."""
    # ---- flatten exactly like the PyTorch forward ----
    if logits.ndim > 2:
        n, c = logits.shape[0], logits.shape[1]
        x = logits.reshape(n, c, -1)            # (N, C, S)
        x = jnp.transpose(x, (0, 2, 1))         # (N, S, C)
        x = x.reshape(-1, c)                    # (N*S, C)
    else:
        x = logits
    num_rows, num_classes = x.shape
    t = target.reshape(-1).astype(jnp.int32)

    # ---- alpha handling (host-side, mirrors the nn.Module __init__) ----
    if isinstance(alpha, (float, int)):
        alpha_vec = jnp.asarray([float(alpha), 1.0 - float(alpha)], jnp.float32)
    elif isinstance(alpha, (list, tuple)):
        alpha_vec = jnp.asarray(alpha, dtype=jnp.float32)
    elif alpha is None:
        alpha_vec = None
    else:
        alpha_vec = jnp.asarray(alpha, dtype=jnp.float32)
    if alpha_vec is not None:
        if alpha_vec.shape[0] < num_classes:
            # Unused entries (targets must be valid indices into alpha anyway).
            alpha_vec = jnp.pad(alpha_vec, (0, num_classes - alpha_vec.shape[0]))
        alpha_2d = alpha_vec[:num_classes].reshape(1, num_classes)
    has_alpha = alpha_vec is not None

    # ---- batch tiling ----
    tb = tile_rows if tile_rows is not None else _choose_tile_rows(num_rows,
                                                                   num_classes)
    tb = max(8, ((tb + 7) // 8) * 8)
    grid_n = pl.cdiv(num_rows, tb)
    rows_pad = grid_n * tb
    if rows_pad != num_rows:
        x = jnp.pad(x, ((0, rows_pad - num_rows), (0, 0)))
        t = jnp.pad(t, ((0, rows_pad - num_rows),))
    t2 = t.reshape(rows_pad, 1)

    kernel = functools.partial(
        _focal_loss_kernel,
        gamma=float(gamma),
        num_rows=num_rows,
        size_average=bool(size_average),
        has_alpha=has_alpha,
    )

    in_specs = [
        pl.BlockSpec((tb, num_classes), lambda i: (i, 0)),
        pl.BlockSpec((tb, 1), lambda i: (i, 0)),
    ]
    inputs = [x, t2]
    if has_alpha:
        in_specs.append(pl.BlockSpec((1, num_classes), lambda i: (0, 0)))
        inputs.append(alpha_2d)

    out = pl.pallas_call(
        kernel,
        out_shape=jax.ShapeDtypeStruct((1, 1), jnp.float32),
        grid_spec=pltpu.PrefetchScalarGridSpec(
            num_scalar_prefetch=0,
            grid=(grid_n,),
            in_specs=in_specs,
            out_specs=pl.BlockSpec((1, 1), lambda i: (0, 0)),
        ),
        compiler_params=pltpu.CompilerParams(
            dimension_semantics=("arbitrary",),
            vmem_limit_bytes=32 * 1024 * 1024,
        ),
    )(*inputs)
    return out[0, 0]


def _focal_loss_ref(logits, target, *, gamma, alpha, size_average):
    # Pure-JAX reference for sanity checking.
    if logits.ndim > 2:
        n, c = logits.shape[0], logits.shape[1]
        x = jnp.transpose(logits.reshape(n, c, -1), (0, 2, 1)).reshape(-1, c)
    else:
        x = logits
    t = target.reshape(-1).astype(jnp.int32)
    logp = jax.nn.log_softmax(x.astype(jnp.float32), axis=-1)
    logpt = jnp.take_along_axis(logp, t[:, None], axis=1)[:, 0]
    pt = jnp.exp(logpt)
    if alpha is not None:
        logpt = logpt * alpha[t]
    loss = -((1.0 - pt) ** gamma) * logpt
    return loss.mean() if size_average else loss.sum()


if __name__ == "__main__":
    # Small 4-D input exercises the dim>2 flatten path: (N, C, H, W).
    N, C, H, W = 2, 5, 12, 12          # flattened batch B = 288 (not a x128)
    gamma = 2.0
    alpha = [0.1, 0.3, 0.2, 0.25, 0.15]

    key = jax.random.PRNGKey(0)
    k1, k2 = jax.random.split(key)
    logits = jax.random.normal(k1, (N, C, H, W), dtype=jnp.float32)
    target = jax.random.randint(k2, (N, H, W), 0, C, dtype=jnp.int32)

    # tile_rows=128 -> grid of 3 steps with padded-row masking on the last tile.
    loss = focal_loss(logits, target, gamma=gamma, alpha=alpha,
                      size_average=True, tile_rows=128)
    jax.block_until_ready(loss)

    ref = _focal_loss_ref(logits, target, gamma=gamma,
                          alpha=jnp.asarray(alpha, jnp.float32),
                          size_average=True)
    assert jnp.allclose(loss, ref, rtol=1e-5, atol=1e-5), (loss, ref)

    # Also check the no-alpha / sum-reduction / 2-D path once.
    loss2 = focal_loss(logits.reshape(N, C, -1).transpose(0, 2, 1).reshape(-1, C),
                       target.reshape(-1), gamma=0.0, alpha=None,
                       size_average=False)
    jax.block_until_ready(loss2)
    ref2 = _focal_loss_ref(logits, target, gamma=0.0, alpha=None,
                           size_average=False)
    assert jnp.allclose(loss2, ref2, rtol=1e-5, atol=1e-4), (loss2, ref2)

    print("KERNEL_OK")
</pallas_src>

<mosaic_0001>
module attributes {stable_mosaic.version = 11 : i64} {
  func.func @_focal_loss_kernel(%arg0: i32, %arg1: memref<128x5xf32, #tpu.memory_space<vmem>>, %arg2: memref<128x1xi32, #tpu.memory_space<vmem>>, %arg3: memref<1x5xf32, #tpu.memory_space<vmem>>, %arg4: memref<1x1xf32, #tpu.memory_space<vmem>>) attributes {dimension_semantics = [#tpu.dimension_semantics<arbitrary>], iteration_bounds = array<i64: 3>, scalar_prefetch = 0 : i64, scratch_operands = 0 : i64, tpu.core_type = #tpu.core_type<tc>, window_params = [{transform_indices = @transform_0, window_bounds = array<i64: 128, 5>}, {transform_indices = @transform_1, window_bounds = array<i64: 128, 1>}, {pipeline_mode = #tpu.pipeline_mode<synchronous>, transform_indices = @transform_2, window_bounds = array<i64: 1, 5>}, {pipeline_mode = #tpu.pipeline_mode<synchronous>, transform_indices = @transform_3, window_bounds = array<i64: 1, 1>}]} {
    %c0 = arith.constant 0 : index
    %c0_0 = arith.constant 0 : index
    %0 = vector.load %arg1[%c0, %c0_0] : memref<128x5xf32, #tpu.memory_space<vmem>>, vector<128x5xf32>
    %c0_1 = arith.constant 0 : index
    %c0_2 = arith.constant 0 : index
    %1 = vector.load %arg2[%c0_1, %c0_2] : memref<128x1xi32, #tpu.memory_space<vmem>>, vector<128x1xi32>
    %cst = arith.constant dense<0xFF800000> : vector<128xf32>
    %2 = vector.multi_reduction <maximumf>, %0, %cst [1] : vector<128x5xf32> to vector<128xf32>
    %3 = vector.shape_cast %2 : vector<128xf32> to vector<128x1xf32>
    %4 = vector.broadcast %3 : vector<128x1xf32> to vector<128x5xf32>
    %5 = arith.subf %0, %4 : vector<128x5xf32>
    %6 = math.exp %5 : vector<128x5xf32>
    %cst_3 = arith.constant dense<0.000000e+00> : vector<128xf32>
    %7 = vector.multi_reduction <add>, %6, %cst_3 [1] : vector<128x5xf32> to vector<128xf32>
    %8 = vector.shape_cast %7 : vector<128xf32> to vector<128x1xf32>
    %9 = math.log %8 : vector<128x1xf32>
    %10 = tpu.iota {dimensions = array<i32: 1>} : vector<128x5xi32>
    %11 = vector.broadcast %1 : vector<128x1xi32> to vector<128x5xi32>
    %12 = arith.cmpi eq, %10, %11 : vector<128x5xi32>
    %cst_4 = arith.constant 0.000000e+00 : f32
    %13 = vector.broadcast %cst_4 : f32 to vector<128x5xf32>
    %14 = arith.select %12, %5, %13 : vector<128x5xi1>, vector<128x5xf32>
    %cst_5 = arith.constant dense<0.000000e+00> : vector<128xf32>
    %15 = vector.multi_reduction <add>, %14, %cst_5 [1] : vector<128x5xf32> to vector<128xf32>
    %16 = vector.shape_cast %15 : vector<128xf32> to vector<128x1xf32>
    %17 = arith.subf %16, %9 : vector<128x1xf32>
    %18 = math.exp %17 : vector<128x1xf32>
    %c0_6 = arith.constant 0 : index
    %c0_7 = arith.constant 0 : index
    %19 = vector.load %arg3[%c0_6, %c0_7] : memref<1x5xf32, #tpu.memory_space<vmem>>, vector<1x5xf32>
    %cst_8 = arith.constant 0.000000e+00 : f32
    %20 = vector.shape_cast %19 : vector<1x5xf32> to vector<1x5xf32>
    %21 = vector.broadcast %20 : vector<1x5xf32> to vector<128x5xf32>
    %22 = vector.broadcast %cst_8 : f32 to vector<128x5xf32>
    %23 = arith.select %12, %21, %22 : vector<128x5xi1>, vector<128x5xf32>
    %cst_9 = arith.constant dense<0.000000e+00> : vector<128xf32>
    %24 = vector.multi_reduction <add>, %23, %cst_9 [1] : vector<128x5xf32> to vector<128xf32>
    %25 = vector.shape_cast %24 : vector<128xf32> to vector<128x1xf32>
    %26 = arith.mulf %17, %25 : vector<128x1xf32>
    %cst_10 = arith.constant 1.000000e+00 : f32
    %27 = vector.broadcast %cst_10 : f32 to vector<128x1xf32>
    %28 = arith.subf %27, %18 : vector<128x1xf32>
    %cst_11 = arith.constant 2.000000e+00 : f32
    %29 = vector.broadcast %cst_11 : f32 to vector<128x1xf32>
    %30 = math.powf %28, %29 : vector<128x1xf32>
    %cst_12 = arith.constant 0.000000e+00 : f32
    %31 = vector.broadcast %cst_12 : f32 to vector<128x1xf32>
    %32 = arith.subf %31, %30 : vector<128x1xf32>
    %33 = arith.mulf %32, %26 : vector<128x1xf32>
    %34 = tpu.iota {dimensions = array<i32: 0>} : vector<128x1xi32>
    %c128_i32 = arith.constant 128 : i32
    %35 = arith.muli %arg0, %c128_i32 : i32
    %36 = vector.broadcast %35 : i32 to vector<128x1xi32>
    %37 = arith.addi %34, %36 : vector<128x1xi32>
    %c288_i32 = arith.constant 288 : i32
    %38 = vector.broadcast %c288_i32 : i32 to vector<128x1xi32>
    %39 = arith.cmpi slt, %37, %38 : vector<128x1xi32>
    %cst_13 = arith.constant 0.000000e+00 : f32
    %40 = vector.broadcast %cst_13 : f32 to vector<128x1xf32>
    %41 = arith.select %39, %33, %40 : vector<128x1xi1>, vector<128x1xf32>
    %42 = vector.shape_cast %41 : vector<128x1xf32> to vector<1x128x1xf32>
    %cst_14 = arith.constant dense<0.000000e+00> : vector<1xf32>
    %43 = vector.multi_reduction <add>, %42, %cst_14 [1, 2] : vector<1x128x1xf32> to vector<1xf32>
    %44 = vector.shape_cast %43 : vector<1xf32> to vector<1x1x1xf32>
    %45 = vector.extract %44[0, 0, 0] : f32 from vector<1x1x1xf32>
    %c0_i32 = arith.constant 0 : i32
    %46 = arith.cmpi eq, %arg0, %c0_i32 : i32
    %47 = arith.extui %46 : i1 to i32
    %c0_i32_15 = arith.constant 0 : i32
    %48 = arith.cmpi ne, %47, %c0_i32_15 : i32
    scf.if %48 {
      %cst_21 = arith.constant 0.000000e+00 : f32
      %56 = vector.broadcast %cst_21 : f32 to vector<1x1xf32>
      %c0_22 = arith.constant 0 : index
      %c0_23 = arith.constant 0 : index
      %57 = vector.load %arg4[%c0_22, %c0_23] : memref<1x1xf32, #tpu.memory_space<vmem>>, vector<1x1xf32>
      tpu.vector_store %arg4[%c0_22, %c0_23], %56 {strides = array<i32>} : memref<1x1xf32, #tpu.memory_space<vmem>>, vector<1x1xf32>,
    } else {
    }
    %c0_16 = arith.constant 0 : index
    %c0_17 = arith.constant 0 : index
    %49 = vector.load %arg4[%c0_16, %c0_17] : memref<1x1xf32, #tpu.memory_space<vmem>>, vector<1x1xf32>
    %50 = vector.broadcast %45 : f32 to vector<1x1xf32>
    %51 = arith.addf %49, %50 : vector<1x1xf32>
    %c0_18 = arith.constant 0 : index
    %c0_19 = arith.constant 0 : index
    %52 = vector.load %arg4[%c0_18, %c0_19] : memref<1x1xf32, #tpu.memory_space<vmem>>, vector<1x1xf32>
    tpu.vector_store %arg4[%c0_18, %c0_19], %51 {strides = array<i32>} : memref<1x1xf32, #tpu.memory_space<vmem>>, vector<1x1xf32>,
    %c2_i32 = arith.constant 2 : i32
    %53 = arith.cmpi eq, %arg0, %c2_i32 : i32
    %54 = arith.extui %53 : i1 to i32
    %c0_i32_20 = arith.constant 0 : i32
    %55 = arith.cmpi ne, %54, %c0_i32_20 : i32
    scf.if %55 {
      %c0_21 = arith.constant 0 : index
      %c0_22 = arith.constant 0 : index
      %56 = vector.load %arg4[%c0_21, %c0_22] : memref<1x1xf32, #tpu.memory_space<vmem>>, vector<1x1xf32>
      %cst_23 = arith.constant 2.880000e+02 : f32
      %57 = vector.broadcast %cst_23 : f32 to vector<1x1xf32>
      %58 = arith.divf %56, %57 : vector<1x1xf32>
      %c0_24 = arith.constant 0 : index
      %c0_25 = arith.constant 0 : index
      %59 = vector.load %arg4[%c0_24, %c0_25] : memref<1x1xf32, #tpu.memory_space<vmem>>, vector<1x1xf32>
      tpu.vector_store %arg4[%c0_24, %c0_25], %58 {strides = array<i32>} : memref<1x1xf32, #tpu.memory_space<vmem>>, vector<1x1xf32>,
    } else {
    }
    return
  }
  func.func @transform_0(%arg0: i32) -> (i32, i32) {
    %c0_i32 = arith.constant 0 : i32
    %c0_i32_0 = arith.constant 0 : i32
    return %arg0, %c0_i32 : i32, i32
  }
  func.func @transform_1(%arg0: i32) -> (i32, i32) {
    %c0_i32 = arith.constant 0 : i32
    %c0_i32_0 = arith.constant 0 : i32
    return %arg0, %c0_i32 : i32, i32
  }
  func.func @transform_2(%arg0: i32) -> (i32, i32) {
    %c0_i32 = arith.constant 0 : i32
    %c0_i32_0 = arith.constant 0 : i32
    %c0_i32_1 = arith.constant 0 : i32
    return %c0_i32, %c0_i32_0 : i32, i32
  }
  func.func @transform_3(%arg0: i32) -> (i32, i32) {
    %c0_i32 = arith.constant 0 : i32
    %c0_i32_0 = arith.constant 0 : i32
    %c0_i32_1 = arith.constant 0 : i32
    return %c0_i32, %c0_i32_0 : i32, i32
  }
}

</mosaic_0001>

<llo_original>
// kernel: tpu_custom_call.1
$region0: #{tpu_custom_call.1}
  #allocation0 [shape = 'u32[]', space=smem, size = 0x4, offset = 0x4, fixed_abs, tag = 'smem constant byte address 0x4 - core index']
  #allocation1 [shape = 'u32[144,128]{1,0:T(1,128)}', space=vmem, size = 0x12000, scoped, tag = 'internal scratch']
  %s0 = inlined_call_operand.vmem [shape: f32[384,5], index: 0, kind: input, shape index: {}]
  %s1 = inlined_call_operand.vmem [shape: s32[384,1], index: 1, kind: input, shape index: {}]
  %s2 = inlined_call_operand.vmem [shape: f32[1,5], index: 2, kind: input, shape index: {}]
  %s3 = inlined_call_operand.hbm [shape: f32[1,1], index: 3, kind: output, shape index: {}]
  %s4 = sld [smem:[#allocation0]]
  $region53: #{tpu_custom_call.1} parent=0
    _
  %s6 = ssub.s32 1, %s4
  %s7 = scalar_select 0, %s6, %s4
  $region1: #{tpu_custom_call.1} parent=0
    #allocation2 [shape = 'u8[512]{0}', space=vmem, size = 0x400, scoped, tag = 'output window, operand 0, single buffered']
    #allocation3 [shape = 's32[2]{0}', space=sflag, size = 0x8, scoped, tag = 'scoped memory for tpu_custom_call.1']
    %8 = vsyncpa [#allocation3], 0
    loop: start=0, step=1, limit=5
    $region2: #{tpu_custom_call.1} parent=1 // loop_pre_header
      _
    $region3: #{tpu_custom_call.1} parent=1 // loop_header
      %s10 = sphi 0, %s14
      %p11 = scmp.ge.s32.totalorder %s10, 5
      %s20 = sphi 0, %s22
      %s23 = sphi 0, %s20
      %s24 = sphi 0, %s23
      %s40 = sphi 0, %s24
      %s46 = sphi 0, %s48
      %s49 = sphi 0, %s46
      %s50 = sphi 0, %s49
      %s66 = sphi 0, %s50
      %s70 = sphi 0, %s70
      %s72 = sphi 0, %s70
      %s73 = sphi 0, %s72
      %s87 = sphi 0, %s73
      %s91 = sphi 0, %s91
      %s93 = sphi 0, %s91
      %s94 = sphi 0, %s93
      %s108 = sphi 0, %s94
    $region4: #{tpu_custom_call.1} parent=1 // loop_header_branch
      %13 = sbr.rel (%p11) target = $region8
    $region5: #{tpu_custom_call.1} parent=1 // loop_body
      %s15 = ssub.s32 %s10, 1
      %s16 = ssub.s32 %s10, 2
      %s17 = sadd.s32 %s10, 1
      %s18 = ssub.s32 %s10, %s17
      %p19 = scmp.eq.s32.totalorder %s18, 0
      %s21 = sadd.s32 %s20, 1
      %s22 = scalar_select %p19, %s20, %s21
      %p25 = pneg %p19
      %p26 = scmp.eq.s32.totalorder %s10, 2
      %p27 = por %p25, %p26
      %p28 = scmp.ne.s32.totalorder %s20, %s23
      %p29 = scmp.eq.s32.totalorder %s10, 0
      %p30 = por %p28, %p29
      %p31 = scmp.ne.s32.totalorder %s20, %s23
      %p32 = scmp.eq.s32.totalorder %s15, 2
      %p33 = por %p31, %p32
      %p34 = scmp.ne.s32.totalorder %s23, %s24
      %p35 = scmp.eq.s32.totalorder %s15, 0
      %p36 = por %p34, %p35
      %p37 = scmp.ne.s32.totalorder %s23, %s24
      %p38 = scmp.eq.s32.totalorder %s16, 2
      %p39 = por %p37, %p38
      %p41 = scmp.ne.s32.totalorder %s24, %s40
      %p42 = scmp.eq.s32.totalorder %s16, 0
      %p43 = por %p41, %p42
      %s44 = ssub.s32 %s10, %s17
      %p45 = scmp.eq.s32.totalorder %s44, 0
      %s47 = sadd.s32 %s46, 1
      %s48 = scalar_select %p45, %s46, %s47
      %p51 = pneg %p45
      %p52 = scmp.eq.s32.totalorder %s10, 2
      %p53 = por %p51, %p52
      %p54 = scmp.ne.s32.totalorder %s46, %s49
      %p55 = scmp.eq.s32.totalorder %s10, 0
      %p56 = por %p54, %p55
      %p57 = scmp.ne.s32.totalorder %s46, %s49
      %p58 = scmp.eq.s32.totalorder %s15, 2
      %p59 = por %p57, %p58
      %p60 = scmp.ne.s32.totalorder %s49, %s50
      %p61 = scmp.eq.s32.totalorder %s15, 0
      %p62 = por %p60, %p61
      %p63 = scmp.ne.s32.totalorder %s49, %s50
      %p64 = scmp.eq.s32.totalorder %s16, 2
      %p65 = por %p63, %p64
      %p67 = scmp.ne.s32.totalorder %s50, %s66
      %p68 = scmp.eq.s32.totalorder %s16, 0
      %p69 = por %p67, %p68
      %s71 = sadd.s32 %s70, 1
      %p74 = scmp.eq.s32.totalorder %s10, 2
      %p75 = scmp.ne.s32.totalorder %s70, %s72
      %p76 = scmp.eq.s32.totalorder %s10, 0
      %p77 = por %p75, %p76
      %p78 = scmp.ne.s32.totalorder %s70, %s72
      %p79 = scmp.eq.s32.totalorder %s15, 2
      %p80 = por %p78, %p79
      %p81 = scmp.ne.s32.totalorder %s72, %s73
      %p82 = scmp.eq.s32.totalorder %s15, 0
      %p83 = por %p81, %p82
      %p84 = scmp.ne.s32.totalorder %s72, %s73
      %p85 = scmp.eq.s32.totalorder %s16, 2
      %p86 = por %p84, %p85
      %p88 = scmp.ne.s32.totalorder %s73, %s87
      %p89 = scmp.eq.s32.totalorder %s16, 0
      %p90 = por %p88, %p89
      %s92 = sadd.s32 %s91, 1
      %p95 = scmp.eq.s32.totalorder %s10, 2
      %p96 = scmp.ne.s32.totalorder %s91, %s93
      %p97 = scmp.eq.s32.totalorder %s10, 0
      %p98 = por %p96, %p97
      %p99 = scmp.ne.s32.totalorder %s91, %s93
      %p100 = scmp.eq.s32.totalorder %s15, 2
      %p101 = por %p99, %p100
      %p102 = scmp.ne.s32.totalorder %s93, %s94
      %p103 = scmp.eq.s32.totalorder %s15, 0
      %p104 = por %p102, %p103
      %p105 = scmp.ne.s32.totalorder %s93, %s94
      %p106 = scmp.eq.s32.totalorder %s16, 2
      %p107 = por %p105, %p106
      %p109 = scmp.ne.s32.totalorder %s94, %s108
      %p110 = scmp.eq.s32.totalorder %s16, 0
      %p111 = por %p109, %p110
      %p112 = scmp.le.s32.totalorder 1, %s10
      %p113 = scmp.lt.s32.totalorder %s10, 4
      %p114 = pnand %p112, %p113
      %p115 = pneg %p114
      // Predicated region
      $region9: #{tpu_custom_call.1} parent=5 // pred_check
        _
      $region10: #{tpu_custom_call.1} parent=5 // pred_check_branch
        %117 = sbr.rel (%p114) target = $region12
      $region11: #{tpu_custom_call.1} parent=5 // pred_region
        %s118 = ssub.s32 %s10, 1
        // Predicated region
        $region13: #{tpu_custom_call.1} parent=11 // pred_check
          %p119 = pneg %p83
        $region14: #{tpu_custom_call.1} parent=11 // pred_check_branch
          %121 = sbr.rel (%p119) target = $region16
        $region15: #{tpu_custom_call.1} parent=11 // pred_region
          _
        $region16: #{tpu_custom_call.1} parent=11 // pred_fallthru
          _
      $region12: #{tpu_custom_call.1} parent=5 // pred_fallthru
        _
      %p122 = scmp.lt.s32.totalorder %s10, 3
      // Predicated region
      $region17: #{tpu_custom_call.1} parent=5 // pred_check
        %p123 = pneg %p122
      $region18: #{tpu_custom_call.1} parent=5 // pred_check_branch
        %125 = sbr.rel (%p123) target = $region20
      $region19: #{tpu_custom_call.1} parent=5 // pred_region
        // Predicated region
        $region21: #{tpu_custom_call.1} parent=19 // pred_check
          %p126 = pneg %p30
        $region22: #{tpu_custom_call.1} parent=19 // pred_check_branch
          %128 = sbr.rel (%p126) target = $region24
        $region23: #{tpu_custom_call.1} parent=19 // pred_region
          %s129 = smul.u32 16, %s10
          %p130 = scmp.lt.s32.totalorder %s129, 47
          %s131 = scalar_select %p130, %s129, 47
          %s132 = smul.addr %s131, 8
          %s133 = scalar_lea.vmem %s0, %s132
          %s134 = smul.u32 16, %s10
        $region24: #{tpu_custom_call.1} parent=19 // pred_fallthru
          _
        // Predicated region
        $region25: #{tpu_custom_call.1} parent=19 // pred_check
          %p135 = pneg %p56
        $region26: #{tpu_custom_call.1} parent=19 // pred_check_branch
          %137 = sbr.rel (%p135) target = $region28
        $region27: #{tpu_custom_call.1} parent=19 // pred_region
          %s138 = smul.u32 16, %s10
          %p139 = scmp.lt.s32.totalorder %s138, 47
          %s140 = scalar_select %p139, %s138, 47
          %s141 = smul.addr %s140, 8
          %s142 = scalar_lea.vmem %s1, %s141
          %s143 = smul.u32 16, %s10
        $region28: #{tpu_custom_call.1} parent=19 // pred_fallthru
          _
      $region20: #{tpu_custom_call.1} parent=5 // pred_fallthru
        _
      %p144 = scmp.le.s32.totalorder 1, %s10
      %p145 = scmp.lt.s32.totalorder %s10, 4
      %p146 = pnand %p144, %p145
      %p147 = pneg %p146
      // Predicated region
      $region29: #{tpu_custom_call.1} parent=5 // pred_check
        _
      $region30: #{tpu_custom_call.1} parent=5 // pred_check_branch
        %149 = sbr.rel (%p146) target = $region32
      $region31: #{tpu_custom_call.1} parent=5 // pred_region
        %s150 = ssub.s32 %s10, 1
        %s151 = smul.u32 16, %s15
        %p152 = scmp.lt.s32.totalorder %s151, 47
        %s153 = scalar_select %p152, %s151, 47
        %s154 = smul.addr %s153, 8
        %s155 = scalar_lea.vmem %s0, %s154
        %p156 = pneg %p36
        %p157 = pneg %p33
        %s158 = smul.u32 16, %s15
        %p159 = scmp.lt.s32.totalorder %s158, 47
        %s160 = scalar_select %p159, %s158, 47
        %s161 = smul.addr %s160, 8
        %s162 = scalar_lea.vmem %s1, %s161
        %p163 = pneg %p62
        %p164 = pneg %p59
        %p165 = pneg %p83
        %p166 = pneg %p80
        %p167 = pneg %p104
        %p168 = pneg %p101
        %s169 = smul.u32 16, %s15
        %p170 = scmp.lt.s32.totalorder %s169, 47
        %s171 = scalar_select %p170, %s169, 47
        %s172 = smul.addr %s171, 8
        %s173 = scalar_lea.vmem %s0, %s172
        %s174 = smul.u32 16, %s15
        %s175 = smul.u32 16, %s15
        %p176 = scmp.lt.s32.totalorder %s175, 47
        %s177 = scalar_select %p176, %s175, 47
        %s178 = smul.addr %s177, 8
        %s179 = scalar_lea.vmem %s1, %s178
        %s180 = smul.u32 16, %s15
        %v181 = vld [vmem:[%s173] sm:$0xff]
        %v182 = vld [vmem:[%s173 + $0x8] sm:$0xff]
        %v183 = vld [vmem:[%s173 + $0x10] sm:$0xff]
        %v184 = vld [vmem:[%s173 + $0x18] sm:$0xff]
        %v185 = vld [vmem:[%s173 + $0x20] sm:$0xff]
        %v186 = vld [vmem:[%s173 + $0x28] sm:$0xff]
        %v187 = vld [vmem:[%s173 + $0x30] sm:$0xff]
        %v188 = vld [vmem:[%s173 + $0x38] sm:$0xff]
        %v189 = vld [vmem:[%s173 + $0x40] sm:$0xff]
        %v190 = vld [vmem:[%s173 + $0x48] sm:$0xff]
        %v191 = vld [vmem:[%s173 + $0x50] sm:$0xff]
        %v192 = vld [vmem:[%s173 + $0x58] sm:$0xff]
        %v193 = vld [vmem:[%s173 + $0x60] sm:$0xff]
        %v194 = vld [vmem:[%s173 + $0x68] sm:$0xff]
        %v195 = vld [vmem:[%s173 + $0x70] sm:$0xff]
        %v196 = vld [vmem:[%s173 + $0x78] sm:$0xff]
        %v197 = vld [vmem:[%s179] sm:$0xff]
        %v198 = vld [vmem:[%s179 + $0x8] sm:$0xff]
        %v199 = vld [vmem:[%s179 + $0x10] sm:$0xff]
        %v200 = vld [vmem:[%s179 + $0x18] sm:$0xff]
        %v201 = vld [vmem:[%s179 + $0x20] sm:$0xff]
        %v202 = vld [vmem:[%s179 + $0x28] sm:$0xff]
        %v203 = vld [vmem:[%s179 + $0x30] sm:$0xff]
        %v204 = vld [vmem:[%s179 + $0x38] sm:$0xff]
        %v205 = vld [vmem:[%s179 + $0x40] sm:$0xff]
        %v206 = vld [vmem:[%s179 + $0x48] sm:$0xff]
        %v207 = vld [vmem:[%s179 + $0x50] sm:$0xff]
        %v208 = vld [vmem:[%s179 + $0x58] sm:$0xff]
        %v209 = vld [vmem:[%s179 + $0x60] sm:$0xff]
        %v210 = vld [vmem:[%s179 + $0x68] sm:$0xff]
        %v211 = vld [vmem:[%s179 + $0x70] sm:$0xff]
        %v212 = vld [vmem:[%s179 + $0x78] sm:$0xff]
        %vm213 = vcmask 39936
        %v214 = vsel %vm213, %v181, -inf
        %215 = vmax.xlane.f32.xlu0 %v214
        %v216 = vpop.xlane.xlu0 %215
        %v217 = vsel %vm213, %v182, -inf
        %218 = vmax.xlane.f32.xlu0 %v217
        %v219 = vpop.xlane.xlu0 %218
        %v220 = vsel %vm213, %v183, -inf
        %221 = vmax.xlane.f32.xlu0 %v220
        %v222 = vpop.xlane.xlu0 %221
        %v223 = vsel %vm213, %v184, -inf
        %224 = vmax.xlane.f32.xlu0 %v223
        %v225 = vpop.xlane.xlu0 %224
        %v226 = vsel %vm213, %v185, -inf
        %227 = vmax.xlane.f32.xlu0 %v226
        %v228 = vpop.xlane.xlu0 %227
        %v229 = vsel %vm213, %v186, -inf
        %230 = vmax.xlane.f32.xlu0 %v229
        %v231 = vpop.xlane.xlu0 %230
        %v232 = vsel %vm213, %v187, -inf
        %233 = vmax.xlane.f32.xlu0 %v232
        %v234 = vpop.xlane.xlu0 %233
        %v235 = vsel %vm213, %v188, -inf
        %236 = vmax.xlane.f32.xlu0 %v235
        %v237 = vpop.xlane.xlu0 %236
        %v238 = vsel %vm213, %v189, -inf
        %239 = vmax.xlane.f32.xlu0 %v238
        %v240 = vpop.xlane.xlu0 %239
        %v241 = vsel %vm213, %v190, -inf
        %242 = vmax.xlane.f32.xlu0 %v241
        %v243 = vpop.xlane.xlu0 %242
        %v244 = vsel %vm213, %v191, -inf
        %245 = vmax.xlane.f32.xlu0 %v244
        %v246 = vpop.xlane.xlu0 %245
        %v247 = vsel %vm213, %v192, -inf
        %248 = vmax.xlane.f32.xlu0 %v247
        %v249 = vpop.xlane.xlu0 %248
        %v250 = vsel %vm213, %v193, -inf
        %251 = vmax.xlane.f32.xlu0 %v250
        %v252 = vpop.xlane.xlu0 %251
        %v253 = vsel %vm213, %v194, -inf
        %254 = vmax.xlane.f32.xlu0 %v253
        %v255 = vpop.xlane.xlu0 %254
        %v256 = vsel %vm213, %v195, -inf
        %257 = vmax.xlane.f32.xlu0 %v256
        %v258 = vpop.xlane.xlu0 %257
        %v259 = vsel %vm213, %v196, -inf
        %260 = vmax.xlane.f32.xlu0 %v259
        %v261 = vpop.xlane.xlu0 %260
        %v262 = vsub.f32 %v181, %v216
        %v263 = vsub.f32 %v182, %v219
        %v264 = vsub.f32 %v183, %v222
        %v265 = vsub.f32 %v184, %v225
        %v266 = vsub.f32 %v185, %v228
        %v267 = vsub.f32 %v186, %v231
        %v268 = vsub.f32 %v187, %v234
        %v269 = vsub.f32 %v188, %v237
        %v270 = vsub.f32 %v189, %v240
        %v271 = vsub.f32 %v190, %v243
        %v272 = vsub.f32 %v191, %v246
        %v273 = vsub.f32 %v192, %v249
        %v274 = vsub.f32 %v193, %v252
        %v275 = vsub.f32 %v194, %v255
        %v276 = vsub.f32 %v195, %v258
        %v277 = vsub.f32 %v196, %v261
        %v278 = vmul.f32 %v262, 1.442695
        %v279 = vpow.pop %v278
        %v280 = vmul.f32 %v263, 1.442695
        %v281 = vpow.pop %v280
        %v282 = vmul.f32 %v264, 1.442695
        %v283 = vpow.pop %v282
        %v284 = vmul.f32 %v265, 1.442695
        %v285 = vpow.pop %v284
        %v286 = vmul.f32 %v266, 1.442695
        %v287 = vpow.pop %v286
        %v288 = vmul.f32 %v267, 1.442695
        %v289 = vpow.pop %v288
        %v290 = vmul.f32 %v268, 1.442695
        %v291 = vpow.pop %v290
        %v292 = vmul.f32 %v269, 1.442695
        %v293 = vpow.pop %v292
        %v294 = vmul.f32 %v270, 1.442695
        %v295 = vpow.pop %v294
        %v296 = vmul.f32 %v271, 1.442695
        %v297 = vpow.pop %v296
        %v298 = vmul.f32 %v272, 1.442695
        %v299 = vpow.pop %v298
        %v300 = vmul.f32 %v273, 1.442695
        %v301 = vpow.pop %v300
        %v302 = vmul.f32 %v274, 1.442695
        %v303 = vpow.pop %v302
        %v304 = vmul.f32 %v275, 1.442695
        %v305 = vpow.pop %v304
        %v306 = vmul.f32 %v276, 1.442695
        %v307 = vpow.pop %v306
        %v308 = vmul.f32 %v277, 1.442695
        %v309 = vpow.pop %v308
        %v310 = vsel %vm213, %v279, 0.0
        %311 = vadd.xlane.f32.xlu0 %v310
        %v312 = vpop.xlane.xlu0 %311
        %v313 = vsel %vm213, %v281, 0.0
        %314 = vadd.xlane.f32.xlu0 %v313
        %v315 = vpop.xlane.xlu0 %314
        %v316 = vsel %vm213, %v283, 0.0
        %317 = vadd.xlane.f32.xlu0 %v316
        %v318 = vpop.xlane.xlu0 %317
        %v319 = vsel %vm213, %v285, 0.0
        %320 = vadd.xlane.f32.xlu0 %v319
        %v321 = vpop.xlane.xlu0 %320
        %v322 = vsel %vm213, %v287, 0.0
        %323 = vadd.xlane.f32.xlu0 %v322
        %v324 = vpop.xlane.xlu0 %323
        %v325 = vsel %vm213, %v289, 0.0
        %326 = vadd.xlane.f32.xlu0 %v325
        %v327 = vpop.xlane.xlu0 %326
        %v328 = vsel %vm213, %v291, 0.0
        %329 = vadd.xlane.f32.xlu0 %v328
        %v330 = vpop.xlane.xlu0 %329
        %v331 = vsel %vm213, %v293, 0.0
        %332 = vadd.xlane.f32.xlu0 %v331
        %v333 = vpop.xlane.xlu0 %332
        %v334 = vsel %vm213, %v295, 0.0
        %335 = vadd.xlane.f32.xlu0 %v334
        %v336 = vpop.xlane.xlu0 %335
        %v337 = vsel %vm213, %v297, 0.0
        %338 = vadd.xlane.f32.xlu0 %v337
        %v339 = vpop.xlane.xlu0 %338
        %v340 = vsel %vm213, %v299, 0.0
        %341 = vadd.xlane.f32.xlu0 %v340
        %v342 = vpop.xlane.xlu0 %341
        %v343 = vsel %vm213, %v301, 0.0
        %344 = vadd.xlane.f32.xlu0 %v343
        %v345 = vpop.xlane.xlu0 %344
        %v346 = vsel %vm213, %v303, 0.0
        %347 = vadd.xlane.f32.xlu0 %v346
        %v348 = vpop.xlane.xlu0 %347
        %v349 = vsel %vm213, %v305, 0.0
        %350 = vadd.xlane.f32.xlu0 %v349
        %v351 = vpop.xlane.xlu0 %350
        %v352 = vsel %vm213, %v307, 0.0
        %353 = vadd.xlane.f32.xlu0 %v352
        %v354 = vpop.xlane.xlu0 %353
        %v355 = vsel %vm213, %v309, 0.0
        %356 = vadd.xlane.f32.xlu0 %v355
        %v357 = vpop.xlane.xlu0 %356
        %v358 = vlog2.pop %v312
        %v359 = vmul.f32 %v358, 0.6931472
        %v360 = vlog2.pop %v315
        %v361 = vmul.f32 %v360, 0.6931472
        %v362 = vlog2.pop %v318
        %v363 = vmul.f32 %v362, 0.6931472
        %v364 = vlog2.pop %v321
        %v365 = vmul.f32 %v364, 0.6931472
        %v366 = vlog2.pop %v324
        %v367 = vmul.f32 %v366, 0.6931472
        %v368 = vlog2.pop %v327
        %v369 = vmul.f32 %v368, 0.6931472
        %v370 = vlog2.pop %v330
        %v371 = vmul.f32 %v370, 0.6931472
        %v372 = vlog2.pop %v333
        %v373 = vmul.f32 %v372, 0.6931472
        %v374 = vlog2.pop %v336
        %v375 = vmul.f32 %v374, 0.6931472
        %v376 = vlog2.pop %v339
        %v377 = vmul.f32 %v376, 0.6931472
        %v378 = vlog2.pop %v342
        %v379 = vmul.f32 %v378, 0.6931472
        %v380 = vlog2.pop %v345
        %v381 = vmul.f32 %v380, 0.6931472
        %v382 = vlog2.pop %v348
        %v383 = vmul.f32 %v382, 0.6931472
        %v384 = vlog2.pop %v351
        %v385 = vmul.f32 %v384, 0.6931472
        %v386 = vlog2.pop %v354
        %v387 = vmul.f32 %v386, 0.6931472
        %v388 = vlog2.pop %v357
        %v389 = vmul.f32 %v388, 0.6931472
        %v390 = vlaneseq
        %v391 = vand.u32 %v390, 127
        %392 = vset.pattern.permute.xlu0 0
        %393 = vperm.xlu0 %392, %v197
        %v394 = vpop.permute.xlu0 %393
        %395 = vset.pattern.permute.xlu0 0
        %396 = vperm.xlu0 %395, %v198
        %v397 = vpop.permute.xlu0 %396
        %398 = vset.pattern.permute.xlu0 0
        %399 = vperm.xlu0 %398, %v199
        %v400 = vpop.permute.xlu0 %399
        %401 = vset.pattern.permute.xlu0 0
        %402 = vperm.xlu0 %401, %v200
        %v403 = vpop.permute.xlu0 %402
        %404 = vset.pattern.permute.xlu0 0
        %405 = vperm.xlu0 %404, %v201
        %v406 = vpop.permute.xlu0 %405
        %407 = vset.pattern.permute.xlu0 0
        %408 = vperm.xlu0 %407, %v202
        %v409 = vpop.permute.xlu0 %408
        %410 = vset.pattern.permute.xlu0 0
        %411 = vperm.xlu0 %410, %v203
        %v412 = vpop.permute.xlu0 %411
        %413 = vset.pattern.permute.xlu0 0
        %414 = vperm.xlu0 %413, %v204
        %v415 = vpop.permute.xlu0 %414
        %416 = vset.pattern.permute.xlu0 0
        %417 = vperm.xlu0 %416, %v205
        %v418 = vpop.permute.xlu0 %417
        %419 = vset.pattern.permute.xlu0 0
        %420 = vperm.xlu0 %419, %v206
        %v421 = vpop.permute.xlu0 %420
        %422 = vset.pattern.permute.xlu0 0
        %423 = vperm.xlu0 %422, %v207
        %v424 = vpop.permute.xlu0 %423
        %425 = vset.pattern.permute.xlu0 0
        %426 = vperm.xlu0 %425, %v208
        %v427 = vpop.permute.xlu0 %426
        %428 = vset.pattern.permute.xlu0 0
        %429 = vperm.xlu0 %428, %v209
        %v430 = vpop.permute.xlu0 %429
        %431 = vset.pattern.permute.xlu0 0
        %432 = vperm.xlu0 %431, %v210
        %v433 = vpop.permute.xlu0 %432
        %434 = vset.pattern.permute.xlu0 0
        %435 = vperm.xlu0 %434, %v211
        %v436 = vpop.permute.xlu0 %435
        %437 = vset.pattern.permute.xlu0 0
        %438 = vperm.xlu0 %437, %v212
        %v439 = vpop.permute.xlu0 %438
        %vm440 = vcmp.eq.s32.totalorder %v391, %v394
        %vm441 = vcmp.eq.s32.totalorder %v391, %v397
        %vm442 = vcmp.eq.s32.totalorder %v391, %v400
        %vm443 = vcmp.eq.s32.totalorder %v391, %v403
        %vm444 = vcmp.eq.s32.totalorder %v391, %v406
        %vm445 = vcmp.eq.s32.totalorder %v391, %v409
        %vm446 = vcmp.eq.s32.totalorder %v391, %v412
        %vm447 = vcmp.eq.s32.totalorder %v391, %v415
        %vm448 = vcmp.eq.s32.totalorder %v391, %v418
        %vm449 = vcmp.eq.s32.totalorder %v391, %v421
        %vm450 = vcmp.eq.s32.totalorder %v391, %v424
        %vm451 = vcmp.eq.s32.totalorder %v391, %v427
        %vm452 = vcmp.eq.s32.totalorder %v391, %v430
        %vm453 = vcmp.eq.s32.totalorder %v391, %v433
        %vm454 = vcmp.eq.s32.totalorder %v391, %v436
        %vm455 = vcmp.eq.s32.totalorder %v391, %v439
        %v456 = vsel %vm440, %v262, 0.0
        %v457 = vsel %vm441, %v263, 0.0
        %v458 = vsel %vm442, %v264, 0.0
        %v459 = vsel %vm443, %v265, 0.0
        %v460 = vsel %vm444, %v266, 0.0
        %v461 = vsel %vm445, %v267, 0.0
        %v462 = vsel %vm446, %v268, 0.0
        %v463 = vsel %vm447, %v269, 0.0
        %v464 = vsel %vm448, %v270, 0.0
        %v465 = vsel %vm449, %v271, 0.0
        %v466 = vsel %vm450, %v272, 0.0
        %v467 = vsel %vm451, %v273, 0.0
        %v468 = vsel %vm452, %v274, 0.0
        %v469 = vsel %vm453, %v275, 0.0
        %v470 = vsel %vm454, %v276, 0.0
        %v471 = vsel %vm455, %v277, 0.0
        %v472 = vsel %vm213, %v456, 0.0
        %473 = vadd.xlane.f32.xlu0 %v472
        %v474 = vpop.xlane.xlu0 %473
        %v475 = vsel %vm213, %v457, 0.0
        %476 = vadd.xlane.f32.xlu0 %v475
        %v477 = vpop.xlane.xlu0 %476
        %v478 = vsel %vm213, %v458, 0.0
        %479 = vadd.xlane.f32.xlu0 %v478
        %v480 = vpop.xlane.xlu0 %479
        %v481 = vsel %vm213, %v459, 0.0
        %482 = vadd.xlane.f32.xlu0 %v481
        %v483 = vpop.xlane.xlu0 %482
        %v484 = vsel %vm213, %v460, 0.0
        %485 = vadd.xlane.f32.xlu0 %v484
        %v486 = vpop.xlane.xlu0 %485
        %v487 = vsel %vm213, %v461, 0.0
        %488 = vadd.xlane.f32.xlu0 %v487
        %v489 = vpop.xlane.xlu0 %488
        %v490 = vsel %vm213, %v462, 0.0
        %491 = vadd.xlane.f32.xlu0 %v490
        %v492 = vpop.xlane.xlu0 %491
        %v493 = vsel %vm213, %v463, 0.0
        %494 = vadd.xlane.f32.xlu0 %v493
        %v495 = vpop.xlane.xlu0 %494
        %v496 = vsel %vm213, %v464, 0.0
        %497 = vadd.xlane.f32.xlu0 %v496
        %v498 = vpop.xlane.xlu0 %497
        %v499 = vsel %vm213, %v465, 0.0
        %500 = vadd.xlane.f32.xlu0 %v499
        %v501 = vpop.xlane.xlu0 %500
        %v502 = vsel %vm213, %v466, 0.0
        %503 = vadd.xlane.f32.xlu0 %v502
        %v504 = vpop.xlane.xlu0 %503
        %v505 = vsel %vm213, %v467, 0.0
        %506 = vadd.xlane.f32.xlu0 %v505
        %v507 = vpop.xlane.xlu0 %506
        %v508 = vsel %vm213, %v468, 0.0
        %509 = vadd.xlane.f32.xlu0 %v508
        %v510 = vpop.xlane.xlu0 %509
        %v511 = vsel %vm213, %v469, 0.0
        %512 = vadd.xlane.f32.xlu0 %v511
        %v513 = vpop.xlane.xlu0 %512
        %v514 = vsel %vm213, %v470, 0.0
        %515 = vadd.xlane.f32.xlu0 %v514
        %v516 = vpop.xlane.xlu0 %515
        %v517 = vsel %vm213, %v471, 0.0
        %518 = vadd.xlane.f32.xlu0 %v517
        %v519 = vpop.xlane.xlu0 %518
        %v520 = vsub.f32 %v474, %v359
        %v521 = vsub.f32 %v477, %v361
        %v522 = vsub.f32 %v480, %v363
        %v523 = vsub.f32 %v483, %v365
        %v524 = vsub.f32 %v486, %v367
        %v525 = vsub.f32 %v489, %v369
        %v526 = vsub.f32 %v492, %v371
        %v527 = vsub.f32 %v495, %v373
        %v528 = vsub.f32 %v498, %v375
        %v529 = vsub.f32 %v501, %v377
        %v530 = vsub.f32 %v504, %v379
        %v531 = vsub.f32 %v507, %v381
        %v532 = vsub.f32 %v510, %v383
        %v533 = vsub.f32 %v513, %v385
        %v534 = vsub.f32 %v516, %v387
        %v535 = vsub.f32 %v519, %v389
        %v536 = vmul.f32 %v520, 1.442695
        %v537 = vpow.pop %v536
        %v538 = vmul.f32 %v521, 1.442695
        %v539 = vpow.pop %v538
        %v540 = vmul.f32 %v522, 1.442695
        %v541 = vpow.pop %v540
        %v542 = vmul.f32 %v523, 1.442695
        %v543 = vpow.pop %v542
        %v544 = vmul.f32 %v524, 1.442695
        %v545 = vpow.pop %v544
        %v546 = vmul.f32 %v525, 1.442695
        %v547 = vpow.pop %v546
        %v548 = vmul.f32 %v526, 1.442695
        %v549 = vpow.pop %v548
        %v550 = vmul.f32 %v527, 1.442695
        %v551 = vpow.pop %v550
        %v552 = vmul.f32 %v528, 1.442695
        %v553 = vpow.pop %v552
        %v554 = vmul.f32 %v529, 1.442695
        %v555 = vpow.pop %v554
        %v556 = vmul.f32 %v530, 1.442695
        %v557 = vpow.pop %v556
        %v558 = vmul.f32 %v531, 1.442695
        %v559 = vpow.pop %v558
        %v560 = vmul.f32 %v532, 1.442695
        %v561 = vpow.pop %v560
        %v562 = vmul.f32 %v533, 1.442695
        %v563 = vpow.pop %v562
        %v564 = vmul.f32 %v534, 1.442695
        %v565 = vpow.pop %v564
        %v566 = vmul.f32 %v535, 1.442695
        %v567 = vpow.pop %v566
        %v568 = vld [vmem:[%s2] sm:$0x1]
        %v570 = vlaneseq
        %v571 = vshrl.u32 %v570, 7
        %v572 = vsub.s32 0, %v571
        %v573 = vrot.slane %v568, %v572
        %v575 = vsel %vm440, %v573, 0.0
        %v576 = vsel %vm441, %v573, 0.0
        %v577 = vsel %vm442, %v573, 0.0
        %v578 = vsel %vm443, %v573, 0.0
        %v579 = vsel %vm444, %v573, 0.0
        %v580 = vsel %vm445, %v573, 0.0
        %v581 = vsel %vm446, %v573, 0.0
        %v582 = vsel %vm447, %v573, 0.0
        %v583 = vsel %vm448, %v573, 0.0
        %v584 = vsel %vm449, %v573, 0.0
        %v585 = vsel %vm450, %v573, 0.0
        %v586 = vsel %vm451, %v573, 0.0
        %v587 = vsel %vm452, %v573, 0.0
        %v588 = vsel %vm453, %v573, 0.0
        %v589 = vsel %vm454, %v573, 0.0
        %v590 = vsel %vm455, %v573, 0.0
        %v591 = vsel %vm213, %v575, 0.0
        %592 = vadd.xlane.f32.xlu0 %v591
        %v593 = vpop.xlane.xlu0 %592
        %v594 = vsel %vm213, %v576, 0.0
        %595 = vadd.xlane.f32.xlu0 %v594
        %v596 = vpop.xlane.xlu0 %595
        %v597 = vsel %vm213, %v577, 0.0
        %598 = vadd.xlane.f32.xlu0 %v597
        %v599 = vpop.xlane.xlu0 %598
        %v600 = vsel %vm213, %v578, 0.0
        %601 = vadd.xlane.f32.xlu0 %v600
        %v602 = vpop.xlane.xlu0 %601
        %v603 = vsel %vm213, %v579, 0.0
        %604 = vadd.xlane.f32.xlu0 %v603
        %v605 = vpop.xlane.xlu0 %604
        %v606 = vsel %vm213, %v580, 0.0
        %607 = vadd.xlane.f32.xlu0 %v606
        %v608 = vpop.xlane.xlu0 %607
        %v609 = vsel %vm213, %v581, 0.0
        %610 = vadd.xlane.f32.xlu0 %v609
        %v611 = vpop.xlane.xlu0 %610
        %v612 = vsel %vm213, %v582, 0.0
        %613 = vadd.xlane.f32.xlu0 %v612
        %v614 = vpop.xlane.xlu0 %613
        %v615 = vsel %vm213, %v583, 0.0
        %616 = vadd.xlane.f32.xlu0 %v615
        %v617 = vpop.xlane.xlu0 %616
        %v618 = vsel %vm213, %v584, 0.0
        %619 = vadd.xlane.f32.xlu0 %v618
        %v620 = vpop.xlane.xlu0 %619
        %v621 = vsel %vm213, %v585, 0.0
        %622 = vadd.xlane.f32.xlu0 %v621
        %v623 = vpop.xlane.xlu0 %622
        %v624 = vsel %vm213, %v586, 0.0
        %625 = vadd.xlane.f32.xlu0 %v624
        %v626 = vpop.xlane.xlu0 %625
        %v627 = vsel %vm213, %v587, 0.0
        %628 = vadd.xlane.f32.xlu0 %v627
        %v629 = vpop.xlane.xlu0 %628
        %v630 = vsel %vm213, %v588, 0.0
        %631 = vadd.xlane.f32.xlu0 %v630
        %v632 = vpop.xlane.xlu0 %631
        %v633 = vsel %vm213, %v589, 0.0
        %634 = vadd.xlane.f32.xlu0 %v633
        %v635 = vpop.xlane.xlu0 %634
        %v636 = vsel %vm213, %v590, 0.0
        %637 = vadd.xlane.f32.xlu0 %v636
        %v638 = vpop.xlane.xlu0 %637
        %v639 = vmul.f32 %v520, %v593
        %v640 = vmul.f32 %v521, %v596
        %v641 = vmul.f32 %v522, %v599
        %v642 = vmul.f32 %v523, %v602
        %v643 = vmul.f32 %v524, %v605
        %v644 = vmul.f32 %v525, %v608
        %v645 = vmul.f32 %v526, %v611
        %v646 = vmul.f32 %v527, %v614
        %v647 = vmul.f32 %v528, %v617
        %v648 = vmul.f32 %v529, %v620
        %v649 = vmul.f32 %v530, %v623
        %v650 = vmul.f32 %v531, %v626
        %v651 = vmul.f32 %v532, %v629
        %v652 = vmul.f32 %v533, %v632
        %v653 = vmul.f32 %v534, %v635
        %v654 = vmul.f32 %v535, %v638
        %v655 = vsub.f32 1.0, %v537
        %v656 = vsub.f32 1.0, %v539
        %v657 = vsub.f32 1.0, %v541
        %v658 = vsub.f32 1.0, %v543
        %v659 = vsub.f32 1.0, %v545
        %v660 = vsub.f32 1.0, %v547
        %v661 = vsub.f32 1.0, %v549
        %v662 = vsub.f32 1.0, %v551
        %v663 = vsub.f32 1.0, %v553
        %v664 = vsub.f32 1.0, %v555
        %v665 = vsub.f32 1.0, %v557
        %v666 = vsub.f32 1.0, %v559
        %v667 = vsub.f32 1.0, %v561
        %v668 = vsub.f32 1.0, %v563
        %v669 = vsub.f32 1.0, %v565
        %v670 = vsub.f32 1.0, %v567
        %v671 = vpow.f32 %v655, 2.0
        %v672 = vpow.f32 %v656, 2.0
        %v673 = vpow.f32 %v657, 2.0
        %v674 = vpow.f32 %v658, 2.0
        %v675 = vpow.f32 %v659, 2.0
        %v676 = vpow.f32 %v660, 2.0
        %v677 = vpow.f32 %v661, 2.0
        %v678 = vpow.f32 %v662, 2.0
        %v679 = vpow.f32 %v663, 2.0
        %v680 = vpow.f32 %v664, 2.0
        %v681 = vpow.f32 %v665, 2.0
        %v682 = vpow.f32 %v666, 2.0
        %v683 = vpow.f32 %v667, 2.0
        %v684 = vpow.f32 %v668, 2.0
        %v685 = vpow.f32 %v669, 2.0
        %v686 = vpow.f32 %v670, 2.0
        %v687 = vsub.f32 0.0, %v671
        %v688 = vsub.f32 0.0, %v672
        %v689 = vsub.f32 0.0, %v673
        %v690 = vsub.f32 0.0, %v674
        %v691 = vsub.f32 0.0, %v675
        %v692 = vsub.f32 0.0, %v676
        %v693 = vsub.f32 0.0, %v677
        %v694 = vsub.f32 0.0, %v678
        %v695 = vsub.f32 0.0, %v679
        %v696 = vsub.f32 0.0, %v680
        %v697 = vsub.f32 0.0, %v681
        %v698 = vsub.f32 0.0, %v682
        %v699 = vsub.f32 0.0, %v683
        %v700 = vsub.f32 0.0, %v684
        %v701 = vsub.f32 0.0, %v685
        %v702 = vsub.f32 0.0, %v686
        %v703 = vmul.f32 %v687, %v639
        %v704 = vmul.f32 %v688, %v640
        %v705 = vmul.f32 %v689, %v641
        %v706 = vmul.f32 %v690, %v642
        %v707 = vmul.f32 %v691, %v643
        %v708 = vmul.f32 %v692, %v644
        %v709 = vmul.f32 %v693, %v645
        %v710 = vmul.f32 %v694, %v646
        %v711 = vmul.f32 %v695, %v647
        %v712 = vmul.f32 %v696, %v648
        %v713 = vmul.f32 %v697, %v649
        %v714 = vmul.f32 %v698, %v650
        %v715 = vmul.f32 %v699, %v651
        %v716 = vmul.f32 %v700, %v652
        %v717 = vmul.f32 %v701, %v653
        %v718 = vmul.f32 %v702, %v654
        %v719 = vlaneseq
        %v720 = vshrl.u32 %v719, 7
        %v721 = vadd.s32 %v720, 8
        %v722 = vadd.s32 %v720, 16
        %v723 = vadd.s32 %v720, 24
        %v724 = vadd.s32 %v720, 32
        %v725 = vadd.s32 %v720, 40
        %v726 = vadd.s32 %v720, 48
        %v727 = vadd.s32 %v720, 56
        %v728 = vadd.s32 %v720, 64
        %v729 = vadd.s32 %v720, 72
        %v730 = vadd.s32 %v720, 80
        %v731 = vadd.s32 %v720, 88
        %v732 = vadd.s32 %v720, 96
        %v733 = vadd.s32 %v720, 104
        %v734 = vadd.s32 %v720, 112
        %v735 = vadd.s32 %v720, 120
        %s736 = smul.u32 %s15, 128
        %v737 = vstv %s736
        %v738 = vadd.s32 %v720, %v737
        %v739 = vadd.s32 %v721, %v737
        %v740 = vadd.s32 %v722, %v737
        %v741 = vadd.s32 %v723, %v737
        %v742 = vadd.s32 %v724, %v737
        %v743 = vadd.s32 %v725, %v737
        %v744 = vadd.s32 %v726, %v737
        %v745 = vadd.s32 %v727, %v737
        %v746 = vadd.s32 %v728, %v737
        %v747 = vadd.s32 %v729, %v737
        %v748 = vadd.s32 %v730, %v737
        %v749 = vadd.s32 %v731, %v737
        %v750 = vadd.s32 %v732, %v737
        %v751 = vadd.s32 %v733, %v737
        %v752 = vadd.s32 %v734, %v737
        %v753 = vadd.s32 %v735, %v737
        %vm754 = vcmp.lt.s32.totalorder %v738, 288
        %vm755 = vcmp.lt.s32.totalorder %v739, 288
        %vm756 = vcmp.lt.s32.totalorder %v740, 288
        %vm757 = vcmp.lt.s32.totalorder %v741, 288
        %vm758 = vcmp.lt.s32.totalorder %v742, 288
        %vm759 = vcmp.lt.s32.totalorder %v743, 288
        %vm760 = vcmp.lt.s32.totalorder %v744, 288
        %vm761 = vcmp.lt.s32.totalorder %v745, 288
        %vm762 = vcmp.lt.s32.totalorder %v746, 288
        %vm763 = vcmp.lt.s32.totalorder %v747, 288
        %vm764 = vcmp.lt.s32.totalorder %v748, 288
        %vm765 = vcmp.lt.s32.totalorder %v749, 288
        %vm766 = vcmp.lt.s32.totalorder %v750, 288
        %vm767 = vcmp.lt.s32.totalorder %v751, 288
        %vm768 = vcmp.lt.s32.totalorder %v752, 288
        %vm769 = vcmp.lt.s32.totalorder %v753, 288
        %v770 = vsel %vm754, %v703, 0.0
        %v771 = vsel %vm755, %v704, 0.0
        %v772 = vsel %vm756, %v705, 0.0
        %v773 = vsel %vm757, %v706, 0.0
        %v774 = vsel %vm758, %v707, 0.0
        %v775 = vsel %vm759, %v708, 0.0
        %v776 = vsel %vm760, %v709, 0.0
        %v777 = vsel %vm761, %v710, 0.0
        %v778 = vsel %vm762, %v711, 0.0
        %v779 = vsel %vm763, %v712, 0.0
        %v780 = vsel %vm764, %v713, 0.0
        %v781 = vsel %vm765, %v714, 0.0
        %v782 = vsel %vm766, %v715, 0.0
        %v783 = vsel %vm767, %v716, 0.0
        %v784 = vsel %vm768, %v717, 0.0
        %v785 = vsel %vm769, %v718, 0.0
        %vm786 = vcmask 7168
        %v787 = vsel %vm786, %v770, 0.0
        %v788 = vsel %vm786, %v771, 0.0
        %v789 = vadd.f32 %v787, %v788
        %v790 = vsel %vm786, %v772, 0.0
        %v791 = vadd.f32 %v789, %v790
        %v792 = vsel %vm786, %v773, 0.0
        %v793 = vadd.f32 %v791, %v792
        %v794 = vsel %vm786, %v774, 0.0
        %v795 = vadd.f32 %v793, %v794
        %v796 = vsel %vm786, %v775, 0.0
        %v797 = vadd.f32 %v795, %v796
        %v798 = vsel %vm786, %v776, 0.0
        %v799 = vadd.f32 %v797, %v798
        %v800 = vsel %vm786, %v777, 0.0
        %v801 = vadd.f32 %v799, %v800
        %v802 = vsel %vm786, %v778, 0.0
        %v803 = vadd.f32 %v801, %v802
        %v804 = vsel %vm786, %v779, 0.0
        %v805 = vadd.f32 %v803, %v804
        %v806 = vsel %vm786, %v780, 0.0
        %v807 = vadd.f32 %v805, %v806
        %v808 = vsel %vm786, %v781, 0.0
        %v809 = vadd.f32 %v807, %v808
        %v810 = vsel %vm786, %v782, 0.0
        %v811 = vadd.f32 %v809, %v810
        %v812 = vsel %vm786, %v783, 0.0
        %v813 = vadd.f32 %v811, %v812
        %v814 = vsel %vm786, %v784, 0.0
        %v815 = vadd.f32 %v813, %v814
        %v816 = vsel %vm786, %v785, 0.0
        %v817 = vadd.f32 %v815, %v816
        %818 = vadd.xlane.f32.xlu0 %v817
        %v819 = vpop.xlane.xlu0 %818
        %v820 = vrot.slane %v819, 4
        %v821 = vadd.f32 %v819, %v820
        %v822 = vrot.slane %v821, 2
        %v823 = vadd.f32 %v821, %v822
        %v824 = vrot.slane %v823, 1
        %v825 = vadd.f32 %v823, %v824
        %s826 = vtos %v825
        %p827 = scmp.eq.s32.totalorder %s15, 0
        // Predicated region
        $region33: #{tpu_custom_call.1} parent=31 // pred_check
          %p828 = pneg %p827
        $region34: #{tpu_custom_call.1} parent=31 // pred_check_branch
          %830 = sbr.rel (%p828) target = $region36
        $region35: #{tpu_custom_call.1} parent=31 // pred_region
          %vm831 = vcmask 0
          %832 = vst.msk [vmem:[#allocation2] sm:$0x1] %vm831, 0.0
        $region36: #{tpu_custom_call.1} parent=31 // pred_fallthru
          _
        %v833 = vld [vmem:[#allocation2] sm:$0x1]
        %v834 = vstv %s826
        %v835 = vadd.f32 %v833, %v834
        %vm836 = vcmask 0
        %837 = vst.msk [vmem:[#allocation2] sm:$0x1] %vm836, %v835
        %p838 = scmp.eq.s32.totalorder %s15, 2
        // Predicated region
        $region37: #{tpu_custom_call.1} parent=31 // pred_check
          %p839 = pneg %p838
        $region38: #{tpu_custom_call.1} parent=31 // pred_check_branch
          %841 = sbr.rel (%p839) target = $region40
        $region39: #{tpu_custom_call.1} parent=31 // pred_region
          %v842 = vld [vmem:[#allocation2] sm:$0x1]
          %v843 = vrcp.pop 288.0
          %v844 = vmul.f32 %v842, %v843
          %845 = vst.msk [vmem:[#allocation2] sm:$0x1] %vm836, %v844
        $region40: #{tpu_custom_call.1} parent=31 // pred_fallthru
          _
        // Predicated region
        $region41: #{tpu_custom_call.1} parent=31 // pred_check
          %p846 = pneg %p101
        $region42: #{tpu_custom_call.1} parent=31 // pred_check_branch
          %848 = sbr.rel (%p846) target = $region44
        $region43: #{tpu_custom_call.1} parent=31 // pred_region
          %s850 = ssub.s32 16, 16
          %851 = vsyncadd [#allocation3], %s850
          %s853 = sshll.u32 [#allocation2], 4
          %s854 = int_to_ptr.vmem [resolvable:$true] %s853
          %856 = dma.vmem_to_hbm [thread:$0]  %s854, 16, %s3, [#allocation3]
        $region44: #{tpu_custom_call.1} parent=31 // pred_fallthru
          _
        // Predicated region
        $region45: #{tpu_custom_call.1} parent=31 // pred_check
          %p857 = pneg %p101
        $region46: #{tpu_custom_call.1} parent=31 // pred_check_branch
          %859 = sbr.rel (%p857) target = $region48
        $region47: #{tpu_custom_call.1} parent=31 // pred_region
          %860 = dma.done [#allocation3], 16
        $region48: #{tpu_custom_call.1} parent=31 // pred_fallthru
          _
      $region32: #{tpu_custom_call.1} parent=5 // pred_fallthru
        _
      %p861 = scmp.le.s32.totalorder 2, %s10
      // Predicated region
      $region49: #{tpu_custom_call.1} parent=5 // pred_check
        %p862 = pneg %p861
      $region50: #{tpu_custom_call.1} parent=5 // pred_check_branch
        %864 = sbr.rel (%p862) target = $region52
      $region51: #{tpu_custom_call.1} parent=5 // pred_region
        %s865 = ssub.s32 %s10, 2
      $region52: #{tpu_custom_call.1} parent=5 // pred_fallthru
        _
    $region6: #{tpu_custom_call.1} parent=1 // loop_footer
      %s14 = sadd.s32 1, %s10
    $region7: #{tpu_custom_call.1} parent=1 // loop_footer_branch
      %9 = sbr.rel target = $region3
    $region8: #{tpu_custom_call.1} parent=1 // loop_exit
      _
    %866 = vsyncpa [#allocation3], 1
    %s867 = scalar_lea.sflag [#allocation3], 1
    %868 = vsyncpa %s867, 1

</llo_original>
